<compile_context>
chip_gen: v5e
topology: v5e:2x2
jax: 0.10.0
libtpu: 0.0.40
codegen_flags: <defaults>
</compile_context>

<pallas_src>
import functools
import math

import numpy as np
import jax
import jax.numpy as jnp
from jax import lax
from jax.experimental import pallas as pl
from jax.experimental.pallas import tpu as pltpu


# ----------------------------------------------------------------------------
# Pallas kernels
# ----------------------------------------------------------------------------

def _edge_agg_kernel(ht_ref, x_ref, escale_ref, xe_ref, acc_ref):
    """Xe = (H^T @ X) * escale ; K-reduction over node tiles.

    ht_ref holds exact integer incidence counts (bf16); the per-edge
    mean/degE scaling is applied in f32 in the last K step.
    """
    k = pl.program_id(1)

    @pl.when(k == 0)
    def _():
        acc_ref[...] = jnp.zeros_like(acc_ref)

    acc_ref[...] += jnp.dot(ht_ref[...], x_ref[...],
                            preferred_element_type=jnp.float32)

    @pl.when(k == pl.num_programs(1) - 1)
    def _():
        xe_ref[...] = (acc_ref[...] * escale_ref[...]).astype(xe_ref.dtype)


def _vertex_epilogue_kernel(h_ref, xe_ref, x0_ref, wt_ref,
                            out_f32_ref, out_bf16_ref, acc_ref,
                            *, deg_v, alpha, beta, use_norm, apply_relu):
    """Xv = H @ Xe (K-reduction over edge tiles) + fused UniGCNII epilogue."""
    k = pl.program_id(1)

    @pl.when(k == 0)
    def _():
        acc_ref[...] = jnp.zeros_like(acc_ref)

    acc_ref[...] += jnp.dot(h_ref[...], xe_ref[...],
                            preferred_element_type=jnp.float32)

    @pl.when(k == pl.num_programs(1) - 1)
    def _():
        xv = acc_ref[...] * deg_v
        if use_norm:
            # normalize_l2: scale = 1/||row||, with 0 for zero rows.
            sumsq = jnp.sum(xv * xv, axis=1, keepdims=True)
            scale = jnp.where(sumsq == 0.0, 0.0, lax.rsqrt(sumsq))  # EUP rsqrt
            xv = xv * scale
        xi = (1.0 - alpha) * xv + alpha * x0_ref[...]
        wxi = jnp.dot(xi, wt_ref[...], preferred_element_type=jnp.float32)
        y = (1.0 - beta) * xi + beta * wxi
        if apply_relu:
            y = jnp.maximum(y, 0.0)
        out_f32_ref[...] = y
        out_bf16_ref[...] = y.astype(jnp.bfloat16)


def _linear_kernel(x_ref, wt_ref, b_ref, out_ref, *, apply_relu):
    """out = x @ W^T + b (W pre-transposed on host), optional ReLU."""
    y = jnp.dot(x_ref[...], wt_ref[...], preferred_element_type=jnp.float32)
    y = y + b_ref[...]
    if apply_relu:
        y = jnp.maximum(y, 0.0)
    out_ref[...] = y


def _pool_logsoftmax_kernel(p_ref, x_ref, out_ref, *, nclass):
    """global_mean_pool (as matmul with pooling matrix P) + masked log_softmax."""
    pooled = jnp.dot(p_ref[...], x_ref[...], preferred_element_type=jnp.float32)
    col = lax.broadcasted_iota(jnp.int32, pooled.shape, 1)
    valid = col < nclass
    masked = jnp.where(valid, pooled, jnp.float32(-1e30))
    m = jnp.max(masked, axis=1, keepdims=True)
    e = jnp.where(valid, jnp.exp(masked - m), 0.0)
    lse = m + jnp.log(jnp.sum(e, axis=1, keepdims=True))
    out_ref[...] = jnp.where(valid, pooled - lse, 0.0)


# ----------------------------------------------------------------------------
# pallas_call wrappers
# ----------------------------------------------------------------------------

# Per-tile working set is well under 1 MiB; 32 MiB leaves ample double-buffer
# headroom on every generation (v7x physical VMEM is 64 MiB).
_VMEM_LIMIT = 32 * 1024 * 1024
_PARAMS_2D = pltpu.CompilerParams(
    dimension_semantics=("parallel", "arbitrary"), vmem_limit_bytes=_VMEM_LIMIT)
_PARAMS_1D = pltpu.CompilerParams(
    dimension_semantics=("parallel",), vmem_limit_bytes=_VMEM_LIMIT)


def edge_aggregate(ht_bf16, x_bf16, escale, *, tm=128, tk=128):
    """Xe = (H^T @ X) * (degE / deg_e), bf16 MXU matmul, f32 accumulate."""
    m_pad, n_pad = ht_bf16.shape
    f = x_bf16.shape[1]
    return pl.pallas_call(
        _edge_agg_kernel,
        out_shape=jax.ShapeDtypeStruct((m_pad, f), jnp.bfloat16),
        grid_spec=pltpu.PrefetchScalarGridSpec(
            num_scalar_prefetch=0,
            grid=(m_pad // tm, n_pad // tk),
            in_specs=[
                pl.BlockSpec((tm, tk), lambda i, k: (i, k)),   # H^T tile
                pl.BlockSpec((tk, f), lambda i, k: (k, 0)),    # X tile
                pl.BlockSpec((tm, 1), lambda i, k: (i, 0)),    # per-edge scale
            ],
            out_specs=pl.BlockSpec((tm, f), lambda i, k: (i, 0)),
            scratch_shapes=[pltpu.VMEM((tm, f), jnp.float32)],
        ),
        compiler_params=_PARAMS_2D,
    )(ht_bf16, x_bf16, escale)


def vertex_epilogue(h_bf16, xe_bf16, x0_f32, wt_f32, *, deg_v, alpha, beta,
                    use_norm, apply_relu, tn=128, tk=128):
    """Xv = H @ Xe + fused degV / norm / alpha-beta / W / ReLU epilogue."""
    n_pad, m_pad = h_bf16.shape
    f = xe_bf16.shape[1]
    kern = functools.partial(_vertex_epilogue_kernel, deg_v=float(deg_v),
                             alpha=float(alpha), beta=float(beta),
                             use_norm=bool(use_norm), apply_relu=bool(apply_relu))
    return pl.pallas_call(
        kern,
        out_shape=(jax.ShapeDtypeStruct((n_pad, f), jnp.float32),
                   jax.ShapeDtypeStruct((n_pad, f), jnp.bfloat16)),
        grid_spec=pltpu.PrefetchScalarGridSpec(
            num_scalar_prefetch=0,
            grid=(n_pad // tn, m_pad // tk),
            in_specs=[
                pl.BlockSpec((tn, tk), lambda i, k: (i, k)),   # H tile
                pl.BlockSpec((tk, f), lambda i, k: (k, 0)),    # Xe tile
                pl.BlockSpec((tn, f), lambda i, k: (i, 0)),    # X0 tile (per-i)
                pl.BlockSpec((f, f), lambda i, k: (0, 0)),     # W^T resident
            ],
            out_specs=[pl.BlockSpec((tn, f), lambda i, k: (i, 0)),
                       pl.BlockSpec((tn, f), lambda i, k: (i, 0))],
            scratch_shapes=[pltpu.VMEM((tn, f), jnp.float32)],
        ),
        compiler_params=_PARAMS_2D,
    )(h_bf16, xe_bf16, x0_f32, wt_f32)


def linear(x, wt, b_row, *, apply_relu, tn=128):
    n_pad, fin = x.shape
    fout = wt.shape[1]
    kern = functools.partial(_linear_kernel, apply_relu=bool(apply_relu))
    return pl.pallas_call(
        kern,
        out_shape=jax.ShapeDtypeStruct((n_pad, fout), jnp.float32),
        grid_spec=pltpu.PrefetchScalarGridSpec(
            num_scalar_prefetch=0,
            grid=(n_pad // tn,),
            in_specs=[
                pl.BlockSpec((tn, fin), lambda i: (i, 0)),
                pl.BlockSpec((fin, fout), lambda i: (0, 0)),
                pl.BlockSpec((1, fout), lambda i: (0, 0)),
            ],
            out_specs=pl.BlockSpec((tn, fout), lambda i: (i, 0)),
        ),
        compiler_params=_PARAMS_1D,
    )(x, wt, b_row)


def pool_logsoftmax(p, x, *, nclass):
    g_pad = p.shape[0]
    c_pad = x.shape[1]
    kern = functools.partial(_pool_logsoftmax_kernel, nclass=int(nclass))
    return pl.pallas_call(
        kern,
        out_shape=jax.ShapeDtypeStruct((g_pad, c_pad), jnp.float32),
        in_specs=[
            pl.BlockSpec(memory_space=pltpu.MemorySpace.VMEM),
            pl.BlockSpec(memory_space=pltpu.MemorySpace.VMEM),
        ],
        out_specs=pl.BlockSpec(memory_space=pltpu.MemorySpace.VMEM),
        compiler_params=pltpu.CompilerParams(vmem_limit_bytes=_VMEM_LIMIT),
    )(p, x)


# ----------------------------------------------------------------------------
# Host-side glue (graph-structure matrices, padding) + full model forward
# ----------------------------------------------------------------------------

def _round_up(x, m):
    return ((x + m - 1) // m) * m


def build_aggregation_matrices(vertex, edges, N, M, deg_e_scalar, n_pad, m_pad):
    """Dense incidence H (integer multiplicities, exact in bf16), its transpose,
    and the per-edge f32 scale escale[e] = degE / deg(e) (0 for empty edges)."""
    H = np.zeros((N, M), np.float32)
    np.add.at(H, (vertex, edges), 1.0)
    edge_deg = H.sum(axis=0)                                   # incidences per edge
    escale = np.where(edge_deg > 0,
                      float(deg_e_scalar) / np.maximum(edge_deg, 1.0),
                      0.0).astype(np.float32)

    H_pad = np.zeros((n_pad, m_pad), np.float32)
    H_pad[:N, :M] = H
    Ht_pad = np.zeros((m_pad, n_pad), np.float32)
    Ht_pad[:M, :N] = H.T
    escale_pad = np.zeros((m_pad, 1), np.float32)
    escale_pad[:M, 0] = escale
    return (jnp.asarray(H_pad, jnp.bfloat16),
            jnp.asarray(Ht_pad, jnp.bfloat16),
            jnp.asarray(escale_pad))


def build_pool_matrix(batch, N, G, n_pad, g_pad):
    counts = np.bincount(batch, minlength=G).astype(np.float32)
    P = np.zeros((g_pad, n_pad), np.float32)
    P[batch, np.arange(N)] = 1.0 / counts[batch]
    return jnp.asarray(P)


def unigcnii2_forward_pallas(x_feat, vertex, edges, batch, params, cfg):
    """Full UniGCNII_2 forward (eval mode) using the Pallas kernels above."""
    vertex = np.asarray(vertex)
    edges = np.asarray(edges)
    batch = np.asarray(batch)

    N, nfeat = x_feat.shape
    M = cfg["num_edges"]
    G = cfg["num_graphs"]
    nhid = params["W_in"].shape[0]          # nhid * nhead
    nclass = params["W_out"].shape[0]
    nlayer = len(params["W_convs"])

    n_pad = _round_up(N, 128)
    m_pad = _round_up(M, 128)
    fin_pad = _round_up(nfeat, 128)
    fh = _round_up(nhid, 128)
    c_pad = _round_up(nclass, 128)
    g_pad = _round_up(G, 8)

    H_bf16, Ht_bf16, escale = build_aggregation_matrices(
        vertex, edges, N, M, cfg["degE"], n_pad, m_pad)
    P = build_pool_matrix(batch, N, G, n_pad, g_pad)

    # zero-padded node features + parameters (zeros keep padded lanes inert)
    x_pad = jnp.zeros((n_pad, fin_pad), jnp.float32).at[:N, :nfeat].set(x_feat)
    wt_in = jnp.zeros((fin_pad, fh), jnp.float32).at[:nfeat, :nhid].set(
        params["W_in"].T)
    b_in = jnp.zeros((1, fh), jnp.float32).at[0, :nhid].set(params["b_in"])
    wt_out = jnp.zeros((fh, c_pad), jnp.float32).at[:nhid, :nclass].set(
        params["W_out"].T)
    b_out = jnp.zeros((1, c_pad), jnp.float32).at[0, :nclass].set(params["b_out"])
    wt_convs = [jnp.zeros((fh, fh), jnp.float32).at[:nhid, :nhid].set(
        params["W_convs"][i].T) for i in range(nlayer)]

    # dropout layers are identity in eval mode (see TODO at top of file)
    x = linear(x_pad, wt_in, b_in, apply_relu=True)            # input Linear+ReLU
    x0 = x
    x_bf16 = x.astype(jnp.bfloat16)                            # only explicit cast

    lamda, alpha = 0.5, 0.1
    for i in range(nlayer):
        beta = math.log(lamda / (i + 1) + 1.0)
        xe = edge_aggregate(Ht_bf16, x_bf16, escale)           # scatter-mean * degE
        x, x_bf16 = vertex_epilogue(H_bf16, xe, x0, wt_convs[i],
                                    deg_v=cfg["degV"], alpha=alpha, beta=beta,
                                    use_norm=cfg["use_norm"], apply_relu=True)

    logits = linear(x, wt_out, b_out, apply_relu=False)        # output Linear
    out = pool_logsoftmax(P, logits, nclass=nclass)            # mean pool + log_softmax
    return out[:G, :nclass]


# ----------------------------------------------------------------------------
# Pure-JAX reference (mirrors the PyTorch forward, f32, scatter semantics)
# ----------------------------------------------------------------------------

def _conv_ref(X, vertex, edges, alpha, beta, X0, degV, degE, M, use_norm, W):
    N, F = X.shape
    Xve = X[vertex]
    sums = jnp.zeros((M, F), jnp.float32).at[edges].add(Xve)
    cnts = jnp.zeros((M,), jnp.float32).at[edges].add(1.0)
    Xe = sums / jnp.maximum(cnts, 1.0)[:, None]                # scatter-mean
    Xe = Xe * degE
    Xev = Xe[edges]
    Xv = jnp.zeros((N, F), jnp.float32).at[vertex].add(Xev)    # scatter-sum
    Xv = Xv * degV
    Xn = Xv
    if use_norm:
        rn = jnp.sqrt(jnp.sum(Xn * Xn, axis=1, keepdims=True))
        scale = jnp.where(rn == 0.0, 0.0, 1.0 / rn)
        Xn = Xn * scale
    Xi = (1.0 - alpha) * Xn + alpha * X0
    return (1.0 - beta) * Xi + beta * (Xi @ W.T)


def unigcnii2_forward_ref(x_feat, vertex, edges, batch, params, cfg):
    vertex = jnp.asarray(vertex)
    edges = jnp.asarray(edges)
    batch = jnp.asarray(batch)
    M, G = cfg["num_edges"], cfg["num_graphs"]
    nlayer = len(params["W_convs"])

    x = jax.nn.relu(x_feat @ params["W_in"].T + params["b_in"])
    x0 = x
    lamda, alpha = 0.5, 0.1
    for i in range(nlayer):
        beta = math.log(lamda / (i + 1) + 1.0)
        x = jax.nn.relu(_conv_ref(x, vertex, edges, alpha, beta, x0,
                                  cfg["degV"], cfg["degE"], M,
                                  cfg["use_norm"], params["W_convs"][i]))
    x = x @ params["W_out"].T + params["b_out"]
    sums = jnp.zeros((G, x.shape[1]), jnp.float32).at[batch].add(x)
    cnts = jnp.zeros((G,), jnp.float32).at[batch].add(1.0)
    pooled = sums / cnts[:, None]
    return jax.nn.log_softmax(pooled, axis=1)


# ----------------------------------------------------------------------------
# Demo
# ----------------------------------------------------------------------------

if __name__ == "__main__":
    key = jax.random.PRNGKey(0)
    keys = jax.random.split(key, 6)

    # Small model config: nfeat=64, nhid=32, nhead=4 -> hidden=128, nclass=6,
    # nlayer=2; hypergraph with N=200 vertices, M=100 hyperedges, 2 graphs.
    N, M, G, NNZ = 200, 100, 2, 600
    nfeat, nhid, nhead, nclass, nlayer = 64, 32, 4, 6, 2
    nhid_total = nhid * nhead

    cfg = dict(num_edges=M, num_graphs=G, use_norm=True,      # args.UniGNN_use_norm
               degV=1.0 / math.sqrt(166.0),                   # args.dname in group1
               degE=1.0 / math.sqrt(10.0))

    # node features
    x_feat = jax.random.normal(keys[0], (N, nfeat), dtype=jnp.float32)

    # hypergraph incidence lists (writable host copies)
    vertex = np.array(jax.device_get(jax.random.randint(keys[1], (NNZ,), 0, N)),
                      dtype=np.int32)
    edges = np.array(jax.device_get(jax.random.randint(keys[2], (NNZ,), 0, M)),
                     dtype=np.int32)
    edges[:M] = np.arange(M, dtype=np.int32)   # every hyperedge id appears

    # graph assignment for global_mean_pool
    batch = np.zeros((N,), dtype=np.int32)
    batch[N // 2:] = 1

    # deterministic nn.Linear inits: U(-1/sqrt(fan_in), 1/sqrt(fan_in))
    def linear_init(k, fout, fin):
        kw, kb = jax.random.split(k)
        bound = 1.0 / np.sqrt(fin)
        W = jax.random.uniform(kw, (fout, fin), minval=-bound, maxval=bound,
                               dtype=jnp.float32)
        b = jax.random.uniform(kb, (fout,), minval=-bound, maxval=bound,
                               dtype=jnp.float32)
        return W, b

    W_in, b_in = linear_init(keys[3], nhid_total, nfeat)
    W_out, b_out = linear_init(keys[4], nclass, nhid_total)
    conv_keys = jax.random.split(keys[5], nlayer)
    bound_c = 1.0 / np.sqrt(nhid_total)
    W_convs = [jax.random.uniform(conv_keys[i], (nhid_total, nhid_total),
                                  minval=-bound_c, maxval=bound_c,
                                  dtype=jnp.float32)
               for i in range(nlayer)]
    params = dict(W_in=W_in, b_in=b_in, W_out=W_out, b_out=b_out, W_convs=W_convs)

    out = unigcnii2_forward_pallas(x_feat, vertex, edges, batch, params, cfg)
    out = jax.block_until_ready(out)

    ref = unigcnii2_forward_ref(x_feat, vertex, edges, batch, params, cfg)
    ref = jax.block_until_ready(ref)

    assert out.shape == (G, nclass)
    # bf16 aggregation matmuls vs f32 scatter reference -> loosened tolerance
    np.testing.assert_allclose(np.asarray(out), np.asarray(ref),
                               rtol=2e-2, atol=2e-2)
    print("KERNEL_OK")
</pallas_src>

<mosaic_0001>
module attributes {stable_mosaic.version = 11 : i64} {
  func.func @_linear_kernel(%arg0: i32, %arg1: memref<128x128xf32, #tpu.memory_space<vmem>>, %arg2: memref<128x128xf32, #tpu.memory_space<vmem>>, %arg3: memref<1x128xf32, #tpu.memory_space<vmem>>, %arg4: memref<128x128xf32, #tpu.memory_space<vmem>>) attributes {dimension_semantics = [#tpu.dimension_semantics<parallel>], iteration_bounds = array<i64: 2>, scalar_prefetch = 0 : i64, scratch_operands = 0 : i64, tpu.core_type = #tpu.core_type<tc>, window_params = [{transform_indices = @transform_0, window_bounds = array<i64: 128, 128>}, {pipeline_mode = #tpu.pipeline_mode<synchronous>, transform_indices = @transform_1, window_bounds = array<i64: 128, 128>}, {pipeline_mode = #tpu.pipeline_mode<synchronous>, transform_indices = @transform_2, window_bounds = array<i64: 1, 128>}, {transform_indices = @transform_3, window_bounds = array<i64: 128, 128>}]} {
    %c0 = arith.constant 0 : index
    %c0_0 = arith.constant 0 : index
    %0 = vector.load %arg1[%c0, %c0_0] : memref<128x128xf32, #tpu.memory_space<vmem>>, vector<128x128xf32>
    %c0_1 = arith.constant 0 : index
    %c0_2 = arith.constant 0 : index
    %1 = vector.load %arg2[%c0_1, %c0_2] : memref<128x128xf32, #tpu.memory_space<vmem>>, vector<128x128xf32>
    %cst = arith.constant dense<0.000000e+00> : vector<128x128xf32>
    %2 = tpu.matmul %0, %1, %cst {dimension_numbers = #tpu.dot_dimension_numbers<[1], [0], [0], [1], [0, 0, 1, 1], [], []>} : vector<128x128xf32>, vector<128x128xf32>, vector<128x128xf32> -> vector<128x128xf32>
    %c0_3 = arith.constant 0 : index
    %c0_4 = arith.constant 0 : index
    %3 = vector.load %arg3[%c0_3, %c0_4] : memref<1x128xf32, #tpu.memory_space<vmem>>, vector<1x128xf32>
    %4 = vector.broadcast %3 : vector<1x128xf32> to vector<128x128xf32>
    %5 = arith.addf %2, %4 : vector<128x128xf32>
    %cst_5 = arith.constant 0.000000e+00 : f32
    %6 = vector.broadcast %cst_5 : f32 to vector<128x128xf32>
    %7 = arith.maximumf %5, %6 : vector<128x128xf32>
    %c0_6 = arith.constant 0 : index
    %c0_7 = arith.constant 0 : index
    %8 = vector.load %arg4[%c0_6, %c0_7] : memref<128x128xf32, #tpu.memory_space<vmem>>, vector<128x128xf32>
    tpu.vector_store %arg4[%c0_6, %c0_7], %7 {strides = array<i32>} : memref<128x128xf32, #tpu.memory_space<vmem>>, vector<128x128xf32>,
    return
  }
  func.func @transform_0(%arg0: i32) -> (i32, i32) {
    %c0_i32 = arith.constant 0 : i32
    %c0_i32_0 = arith.constant 0 : i32
    return %arg0, %c0_i32 : i32, i32
  }
  func.func @transform_1(%arg0: i32) -> (i32, i32) {
    %c0_i32 = arith.constant 0 : i32
    %c0_i32_0 = arith.constant 0 : i32
    %c0_i32_1 = arith.constant 0 : i32
    return %c0_i32, %c0_i32_0 : i32, i32
  }
  func.func @transform_2(%arg0: i32) -> (i32, i32) {
    %c0_i32 = arith.constant 0 : i32
    %c0_i32_0 = arith.constant 0 : i32
    %c0_i32_1 = arith.constant 0 : i32
    return %c0_i32, %c0_i32_0 : i32, i32
  }
  func.func @transform_3(%arg0: i32) -> (i32, i32) {
    %c0_i32 = arith.constant 0 : i32
    %c0_i32_0 = arith.constant 0 : i32
    return %arg0, %c0_i32 : i32, i32
  }
}

</mosaic_0001>

<llo_original>
// kernel: tpu_custom_call.1
$region0: #{tpu_custom_call.1}
  #allocation0 [shape = 'u32[]', space=smem, size = 0x4, offset = 0x4, fixed_abs, tag = 'smem constant byte address 0x4 - core index']
  #allocation1 [shape = 'u32[72,128]{1,0:T(1,128)}', space=vmem, size = 0x9000, scoped, tag = 'internal scratch']
  %s0 = inlined_call_operand.hbm [shape: f32[256,128], index: 0, kind: input, shape index: {}]
  %s1 = inlined_call_operand.hbm [shape: f32[128,128], index: 1, kind: input, shape index: {}]
  %s2 = inlined_call_operand.vmem [shape: f32[1,128], index: 2, kind: input, shape index: {}]
  %s3 = inlined_call_operand.hbm [shape: f32[256,128], index: 3, kind: output, shape index: {}]
  %s4 = sld [smem:[#allocation0]]
  $region53: #{tpu_custom_call.1} parent=0
    _
  %s6 = ssub.s32 1, %s4
  %s7 = scalar_select 0, %s6, %s4
  $region1: #{tpu_custom_call.1} parent=0
    #allocation2 [shape = 'u8[131072]{0}', space=vmem, size = 0x20000, scoped, tag = 'input window, operand 0']
    #allocation3 [shape = 's32[2]{0}', space=sflag, size = 0x8, scoped, tag = 'scoped memory for tpu_custom_call.1']
    #allocation4 [shape = 's32[2]{0}', space=sflag, size = 0x8, scoped, tag = 'scoped memory for tpu_custom_call.1']
    #allocation5 [shape = 'u8[65536]{0}', space=vmem, size = 0x10000, scoped, tag = 'input window, operand 1, single buffered']
    #allocation6 [shape = 's32[1]{0}', space=sflag, size = 0x4, scoped, tag = 'scoped memory for tpu_custom_call.1']
    #allocation7 [shape = 'u8[131072]{0}', space=vmem, size = 0x20000, scoped, tag = 'output window, operand 0']
    %8 = vsyncpa [#allocation3], 0
    %s9 = scalar_lea.sflag [#allocation3], 1
    %10 = vsyncpa %s9, 0
    %11 = vsyncpa [#allocation6], 0
    %12 = vsyncpa [#allocation4], 0
    %s13 = scalar_lea.sflag [#allocation4], 1
    %14 = vsyncpa %s13, 0
    loop: start=0, step=1, limit=4
    $region2: #{tpu_custom_call.1} parent=1 // loop_pre_header
      _
    $region3: #{tpu_custom_call.1} parent=1 // loop_header
      %s16 = sphi 0, %s20
      %p17 = scmp.ge.s32.totalorder %s16, 4
      %s26 = sphi 0, %s28
      %s29 = sphi 0, %s26
      %s30 = sphi 0, %s29
      %s46 = sphi 0, %s30
      %s50 = sphi 0, %s50
      %s52 = sphi 0, %s50
      %s53 = sphi 0, %s52
      %s67 = sphi 0, %s53
      %s71 = sphi 0, %s71
      %s73 = sphi 0, %s71
      %s74 = sphi 0, %s73
      %s88 = sphi 0, %s74
      %s94 = sphi 0, %s96
      %s97 = sphi 0, %s94
      %s98 = sphi 0, %s97
      %s114 = sphi 0, %s98
    $region4: #{tpu_custom_call.1} parent=1 // loop_header_branch
      %19 = sbr.rel (%p17) target = $region8
    $region5: #{tpu_custom_call.1} parent=1 // loop_body
      %s21 = ssub.s32 %s16, 1
      %s22 = ssub.s32 %s16, 2
      %s23 = sadd.s32 %s16, 1
      %s24 = ssub.s32 %s16, %s23
      %p25 = scmp.eq.s32.totalorder %s24, 0
      %s27 = sadd.s32 %s26, 1
      %s28 = scalar_select %p25, %s26, %s27
      %p31 = pneg %p25
      %p32 = scmp.eq.s32.totalorder %s16, 1
      %p33 = por %p31, %p32
      %p34 = scmp.ne.s32.totalorder %s26, %s29
      %p35 = scmp.eq.s32.totalorder %s16, 0
      %p36 = por %p34, %p35
      %p37 = scmp.ne.s32.totalorder %s26, %s29
      %p38 = scmp.eq.s32.totalorder %s21, 1
      %p39 = por %p37, %p38
      %p40 = scmp.ne.s32.totalorder %s29, %s30
      %p41 = scmp.eq.s32.totalorder %s21, 0
      %p42 = por %p40, %p41
      %p43 = scmp.ne.s32.totalorder %s29, %s30
      %p44 = scmp.eq.s32.totalorder %s22, 1
      %p45 = por %p43, %p44
      %p47 = scmp.ne.s32.totalorder %s30, %s46
      %p48 = scmp.eq.s32.totalorder %s22, 0
      %p49 = por %p47, %p48
      %s51 = sadd.s32 %s50, 1
      %p54 = scmp.eq.s32.totalorder %s16, 1
      %p55 = scmp.ne.s32.totalorder %s50, %s52
      %p56 = scmp.eq.s32.totalorder %s16, 0
      %p57 = por %p55, %p56
      %p58 = scmp.ne.s32.totalorder %s50, %s52
      %p59 = scmp.eq.s32.totalorder %s21, 1
      %p60 = por %p58, %p59
      %p61 = scmp.ne.s32.totalorder %s52, %s53
      %p62 = scmp.eq.s32.totalorder %s21, 0
      %p63 = por %p61, %p62
      %p64 = scmp.ne.s32.totalorder %s52, %s53
      %p65 = scmp.eq.s32.totalorder %s22, 1
      %p66 = por %p64, %p65
      %p68 = scmp.ne.s32.totalorder %s53, %s67
      %p69 = scmp.eq.s32.totalorder %s22, 0
      %p70 = por %p68, %p69
      %s72 = sadd.s32 %s71, 1
      %p75 = scmp.eq.s32.totalorder %s16, 1
      %p76 = scmp.ne.s32.totalorder %s71, %s73
      %p77 = scmp.eq.s32.totalorder %s16, 0
      %p78 = por %p76, %p77
      %p79 = scmp.ne.s32.totalorder %s71, %s73
      %p80 = scmp.eq.s32.totalorder %s21, 1
      %p81 = por %p79, %p80
      %p82 = scmp.ne.s32.totalorder %s73, %s74
      %p83 = scmp.eq.s32.totalorder %s21, 0
      %p84 = por %p82, %p83
      %p85 = scmp.ne.s32.totalorder %s73, %s74
      %p86 = scmp.eq.s32.totalorder %s22, 1
      %p87 = por %p85, %p86
      %p89 = scmp.ne.s32.totalorder %s74, %s88
      %p90 = scmp.eq.s32.totalorder %s22, 0
      %p91 = por %p89, %p90
      %s92 = ssub.s32 %s16, %s23
      %p93 = scmp.eq.s32.totalorder %s92, 0
      %s95 = sadd.s32 %s94, 1
      %s96 = scalar_select %p93, %s94, %s95
      %p99 = pneg %p93
      %p100 = scmp.eq.s32.totalorder %s16, 1
      %p101 = por %p99, %p100
      %p102 = scmp.ne.s32.totalorder %s94, %s97
      %p103 = scmp.eq.s32.totalorder %s16, 0
      %p104 = por %p102, %p103
      %p105 = scmp.ne.s32.totalorder %s94, %s97
      %p106 = scmp.eq.s32.totalorder %s21, 1
      %p107 = por %p105, %p106
      %p108 = scmp.ne.s32.totalorder %s97, %s98
      %p109 = scmp.eq.s32.totalorder %s21, 0
      %p110 = por %p108, %p109
      %p111 = scmp.ne.s32.totalorder %s97, %s98
      %p112 = scmp.eq.s32.totalorder %s22, 1
      %p113 = por %p111, %p112
      %p115 = scmp.ne.s32.totalorder %s98, %s114
      %p116 = scmp.eq.s32.totalorder %s22, 0
      %p117 = por %p115, %p116
      %p118 = scmp.le.s32.totalorder 1, %s16
      %p119 = scmp.lt.s32.totalorder %s16, 3
      %p120 = pnand %p118, %p119
      %p121 = pneg %p120
      // Predicated region
      $region9: #{tpu_custom_call.1} parent=5 // pred_check
        _
      $region10: #{tpu_custom_call.1} parent=5 // pred_check_branch
        %123 = sbr.rel (%p120) target = $region12
      $region11: #{tpu_custom_call.1} parent=5 // pred_region
        %s124 = ssub.s32 %s16, 1
        // Predicated region
        $region13: #{tpu_custom_call.1} parent=11 // pred_check
          %p125 = pneg %p63
        $region14: #{tpu_custom_call.1} parent=11 // pred_check_branch
          %127 = sbr.rel (%p125) target = $region16
        $region15: #{tpu_custom_call.1} parent=11 // pred_region
          %129 = vsyncadd [#allocation6], 0
          %s130 = sshll.u32 %s1, 4
          %s131 = int_to_ptr.hbm [resolvable:$true] %s130
          %s132 = sshll.u32 [#allocation5], 4
          %s133 = int_to_ptr.vmem [resolvable:$true] %s132
          %138 = dma.hbm_to_vmem [thread:$0]  %s131, 2048, %s133, [#allocation6], 128, 128, 8
        $region16: #{tpu_custom_call.1} parent=11 // pred_fallthru
          _
        // Predicated region
        $region17: #{tpu_custom_call.1} parent=11 // pred_check
          %p139 = pneg %p84
        $region18: #{tpu_custom_call.1} parent=11 // pred_check_branch
          %141 = sbr.rel (%p139) target = $region20
        $region19: #{tpu_custom_call.1} parent=11 // pred_region
          _
        $region20: #{tpu_custom_call.1} parent=11 // pred_fallthru
          _
      $region12: #{tpu_custom_call.1} parent=5 // pred_fallthru
        _
      %p142 = scmp.lt.s32.totalorder %s16, 2
      // Predicated region
      $region21: #{tpu_custom_call.1} parent=5 // pred_check
        %p143 = pneg %p142
      $region22: #{tpu_custom_call.1} parent=5 // pred_check_branch
        %145 = sbr.rel (%p143) target = $region24
      $region23: #{tpu_custom_call.1} parent=5 // pred_region
        // Predicated region
        $region25: #{tpu_custom_call.1} parent=23 // pred_check
          %p146 = pneg %p36
        $region26: #{tpu_custom_call.1} parent=23 // pred_check_branch
          %148 = sbr.rel (%p146) target = $region28
        $region27: #{tpu_custom_call.1} parent=23 // pred_region
          %s149 = sand.u32 %s26, 1
          %s150 = scalar_lea.sflag [#allocation3], %s149
          %s151 = sand.u32 %s26, 1
          %s152 = smul.addr %s151, 128
          %s153 = scalar_lea.vmem [#allocation2], %s152
          %s154 = smul.u32 16, %s16
          %156 = vsyncadd %s150, 0
          %s157 = smul.addr %s154, 8
          %s158 = scalar_lea.hbm %s0, %s157
          %s159 = sshll.u32 %s158, 4
          %s160 = int_to_ptr.hbm [resolvable:$true] %s159
          %s161 = sshll.u32 %s153, 4
          %s162 = int_to_ptr.vmem [resolvable:$true] %s161
          %167 = dma.hbm_to_vmem [thread:$0]  %s160, 2048, %s162, %s150, 128, 128, 8
        $region28: #{tpu_custom_call.1} parent=23 // pred_fallthru
          _
      $region24: #{tpu_custom_call.1} parent=5 // pred_fallthru
        _
      %p168 = scmp.le.s32.totalorder 1, %s16
      %p169 = scmp.lt.s32.totalorder %s16, 3
      %p170 = pnand %p168, %p169
      %p171 = pneg %p170
      // Predicated region
      $region29: #{tpu_custom_call.1} parent=5 // pred_check
        _
      $region30: #{tpu_custom_call.1} parent=5 // pred_check_branch
        %173 = sbr.rel (%p170) target = $region32
      $region31: #{tpu_custom_call.1} parent=5 // pred_region
        %s174 = ssub.s32 %s16, 1
        %s175 = sand.u32 %s29, 1
        %s176 = scalar_lea.sflag [#allocation3], %s175
        %s177 = sand.u32 %s29, 1
        %s178 = smul.addr %s177, 128
        %s179 = scalar_lea.vmem [#allocation2], %s178
        // Predicated region
        $region33: #{tpu_custom_call.1} parent=31 // pred_check
          %p180 = pneg %p42
        $region34: #{tpu_custom_call.1} parent=31 // pred_check_branch
          %182 = sbr.rel (%p180) target = $region36
        $region35: #{tpu_custom_call.1} parent=31 // pred_region
          %184 = dma.done %s176, 2048
        $region36: #{tpu_custom_call.1} parent=31 // pred_fallthru
          _
        // Predicated region
        $region37: #{tpu_custom_call.1} parent=31 // pred_check
          %p185 = pneg %p63
        $region38: #{tpu_custom_call.1} parent=31 // pred_check_branch
          %187 = sbr.rel (%p185) target = $region40
        $region39: #{tpu_custom_call.1} parent=31 // pred_region
          %189 = dma.done [#allocation6], 2048
        $region40: #{tpu_custom_call.1} parent=31 // pred_fallthru
          _
        %s190 = sand.u32 %s29, 1
        %s191 = scalar_lea.sflag [#allocation3], %s190
        %s192 = sand.u32 %s29, 1
        %s193 = smul.addr %s192, 128
        %s194 = scalar_lea.vmem [#allocation2], %s193
        %p195 = pneg %p42
        %p196 = pneg %p39
        %p197 = pneg %p63
        %p198 = pneg %p60
        %p199 = pneg %p84
        %p200 = pneg %p81
        %p201 = pneg %p110
        %p202 = pneg %p107
        %s203 = sand.u32 %s97, 1
        %s204 = scalar_lea.sflag [#allocation4], %s203
        %s205 = sand.u32 %s97, 1
        %s206 = smul.addr %s205, 128
        %s207 = scalar_lea.vmem [#allocation7], %s206
        %s208 = smul.u32 16, %s21
        %s209 = smul.u32 16, %s21
        %v210 = vld [vmem:[%s179] sm:$0xff]
        %v211 = vld [vmem:[%s179 + $0x8] sm:$0xff]
        %v212 = vld [vmem:[%s179 + $0x10] sm:$0xff]
        %v213 = vld [vmem:[%s179 + $0x18] sm:$0xff]
        %v214 = vld [vmem:[%s179 + $0x20] sm:$0xff]
        %v215 = vld [vmem:[%s179 + $0x28] sm:$0xff]
        %v216 = vld [vmem:[%s179 + $0x30] sm:$0xff]
        %v217 = vld [vmem:[%s179 + $0x38] sm:$0xff]
        %v218 = vld [vmem:[%s179 + $0x40] sm:$0xff]
        %v219 = vld [vmem:[%s179 + $0x48] sm:$0xff]
        %v220 = vld [vmem:[%s179 + $0x50] sm:$0xff]
        %v221 = vld [vmem:[%s179 + $0x58] sm:$0xff]
        %v222 = vld [vmem:[%s179 + $0x60] sm:$0xff]
        %v223 = vld [vmem:[%s179 + $0x68] sm:$0xff]
        %v224 = vld [vmem:[%s179 + $0x70] sm:$0xff]
        %v225 = vld [vmem:[%s179 + $0x78] sm:$0xff]
        %v226 = vld [vmem:[#allocation5] sm:$0xff]
        %v227 = vld [vmem:[#allocation5 + $0x8] sm:$0xff]
        %v228 = vld [vmem:[#allocation5 + $0x10] sm:$0xff]
        %v229 = vld [vmem:[#allocation5 + $0x18] sm:$0xff]
        %v230 = vld [vmem:[#allocation5 + $0x20] sm:$0xff]
        %v231 = vld [vmem:[#allocation5 + $0x28] sm:$0xff]
        %v232 = vld [vmem:[#allocation5 + $0x30] sm:$0xff]
        %v233 = vld [vmem:[#allocation5 + $0x38] sm:$0xff]
        %v234 = vld [vmem:[#allocation5 + $0x40] sm:$0xff]
        %v235 = vld [vmem:[#allocation5 + $0x48] sm:$0xff]
        %v236 = vld [vmem:[#allocation5 + $0x50] sm:$0xff]
        %v237 = vld [vmem:[#allocation5 + $0x58] sm:$0xff]
        %v238 = vld [vmem:[#allocation5 + $0x60] sm:$0xff]
        %v239 = vld [vmem:[#allocation5 + $0x68] sm:$0xff]
        %v240 = vld [vmem:[#allocation5 + $0x70] sm:$0xff]
        %v241 = vld [vmem:[#allocation5 + $0x78] sm:$0xff]
        %v242 = vld [vmem:[%s2] sm:$0x1]
        %v244 = vperm.slane %v242, 0
        %246 = vmatpush.msra.mxu0 %v241
        %247 = vmatpush.msra.mxu0 %v240
        %248 = vmatpush.msra.mxu0 %v239
        %249 = vmatpush.msra.mxu0 %v238
        %250 = vmatpush.msra.mxu0 %v237
        %251 = vmatpush.msra.mxu0 %v236
        %252 = vmatpush.msra.mxu0 %v235
        %253 = vmatpush.msra.mxu0 %v234
        %254 = vmatpush.msra.mxu0 %v233
        %255 = vmatpush.msra.mxu0 %v232
        %256 = vmatpush.msra.mxu0 %v231
        %257 = vmatpush.msra.mxu0 %v230
        %258 = vmatpush.msra.mxu0 %v229
        %259 = vmatpush.msra.mxu0 %v228
        %260 = vmatpush.msra.mxu0 %v227
        %261 = vmatpush.msra.mxu0 %v226
        %262 = vmatmul.f32.gmra.mxu0 %v210
        %v263 = vpop.f32.mrf.mxu0
        %v264 = vadd.f32 %v244, %v263
        %265 = vmatmul.f32.gmra.mxu0 %v211
        %v266 = vpop.f32.mrf.mxu0
        %v267 = vadd.f32 %v244, %v266
        %268 = vmatmul.f32.gmra.mxu0 %v212
        %v269 = vpop.f32.mrf.mxu0
        %v270 = vadd.f32 %v244, %v269
        %271 = vmatmul.f32.gmra.mxu0 %v213
        %v272 = vpop.f32.mrf.mxu0
        %v273 = vadd.f32 %v244, %v272
        %274 = vmatmul.f32.gmra.mxu0 %v214
        %v275 = vpop.f32.mrf.mxu0
        %v276 = vadd.f32 %v244, %v275
        %277 = vmatmul.f32.gmra.mxu0 %v215
        %v278 = vpop.f32.mrf.mxu0
        %v279 = vadd.f32 %v244, %v278
        %280 = vmatmul.f32.gmra.mxu0 %v216
        %v281 = vpop.f32.mrf.mxu0
        %v282 = vadd.f32 %v244, %v281
        %283 = vmatmul.f32.gmra.mxu0 %v217
        %v284 = vpop.f32.mrf.mxu0
        %v285 = vadd.f32 %v244, %v284
        %286 = vmatmul.f32.gmra.mxu0 %v218
        %v287 = vpop.f32.mrf.mxu0
        %v288 = vadd.f32 %v244, %v287
        %289 = vmatmul.f32.gmra.mxu0 %v219
        %v290 = vpop.f32.mrf.mxu0
        %v291 = vadd.f32 %v244, %v290
        %292 = vmatmul.f32.gmra.mxu0 %v220
        %v293 = vpop.f32.mrf.mxu0
        %v294 = vadd.f32 %v244, %v293
        %295 = vmatmul.f32.gmra.mxu0 %v221
        %v296 = vpop.f32.mrf.mxu0
        %v297 = vadd.f32 %v244, %v296
        %298 = vmatmul.f32.gmra.mxu0 %v222
        %v299 = vpop.f32.mrf.mxu0
        %v300 = vadd.f32 %v244, %v299
        %301 = vmatmul.f32.gmra.mxu0 %v223
        %v302 = vpop.f32.mrf.mxu0
        %v303 = vadd.f32 %v244, %v302
        %304 = vmatmul.f32.gmra.mxu0 %v224
        %v305 = vpop.f32.mrf.mxu0
        %v306 = vadd.f32 %v244, %v305
        %307 = vmatmul.f32.gmra.mxu0 %v225
        %v308 = vpop.f32.mrf.mxu0
        %v309 = vadd.f32 %v244, %v308
        %310 = vdwg.mxu0
        %v311 = vmax.f32 %v264, 0.0
        %v312 = vmax.f32 %v267, 0.0
        %v313 = vmax.f32 %v270, 0.0
        %v314 = vmax.f32 %v273, 0.0
        %v315 = vmax.f32 %v276, 0.0
        %v316 = vmax.f32 %v279, 0.0
        %v317 = vmax.f32 %v282, 0.0
        %v318 = vmax.f32 %v285, 0.0
        %v319 = vmax.f32 %v288, 0.0
        %v320 = vmax.f32 %v291, 0.0
        %v321 = vmax.f32 %v294, 0.0
        %v322 = vmax.f32 %v297, 0.0
        %v323 = vmax.f32 %v300, 0.0
        %v324 = vmax.f32 %v303, 0.0
        %v325 = vmax.f32 %v306, 0.0
        %v326 = vmax.f32 %v309, 0.0
        %327 = vst [vmem:[%s207] sm:$0xff] %v311
        %328 = vst [vmem:[%s207 + $0x8] sm:$0xff] %v312
        %329 = vst [vmem:[%s207 + $0x10] sm:$0xff] %v313
        %330 = vst [vmem:[%s207 + $0x18] sm:$0xff] %v314
        %331 = vst [vmem:[%s207 + $0x20] sm:$0xff] %v315
        %332 = vst [vmem:[%s207 + $0x28] sm:$0xff] %v316
        %333 = vst [vmem:[%s207 + $0x30] sm:$0xff] %v317
        %334 = vst [vmem:[%s207 + $0x38] sm:$0xff] %v318
        %335 = vst [vmem:[%s207 + $0x40] sm:$0xff] %v319
        %336 = vst [vmem:[%s207 + $0x48] sm:$0xff] %v320
        %337 = vst [vmem:[%s207 + $0x50] sm:$0xff] %v321
        %338 = vst [vmem:[%s207 + $0x58] sm:$0xff] %v322
        %339 = vst [vmem:[%s207 + $0x60] sm:$0xff] %v323
        %340 = vst [vmem:[%s207 + $0x68] sm:$0xff] %v324
        %341 = vst [vmem:[%s207 + $0x70] sm:$0xff] %v325
        %342 = vst [vmem:[%s207 + $0x78] sm:$0xff] %v326
        %s343 = sand.u32 %s97, 1
        %s344 = scalar_lea.sflag [#allocation4], %s343
        %s345 = sand.u32 %s97, 1
        %s346 = smul.addr %s345, 128
        %s347 = scalar_lea.vmem [#allocation7], %s346
        // Predicated region
        $region41: #{tpu_custom_call.1} parent=31 // pred_check
          %p348 = pneg %p107
        $region42: #{tpu_custom_call.1} parent=31 // pred_check_branch
          %350 = sbr.rel (%p348) target = $region44
        $region43: #{tpu_custom_call.1} parent=31 // pred_region
          %s351 = smul.u32 16, %s21
          %353 = vsyncadd %s344, 0
          %s354 = smul.addr %s351, 8
          %s355 = scalar_lea.hbm %s3, %s354
          %s356 = sshll.u32 %s347, 4
          %s357 = int_to_ptr.vmem [resolvable:$true] %s356
          %s358 = sshll.u32 %s355, 4
          %s359 = int_to_ptr.hbm [resolvable:$true] %s358
          %364 = dma.vmem_to_hbm [thread:$0]  %s357, 2048, %s359, %s344, 128, 128, 8
        $region44: #{tpu_custom_call.1} parent=31 // pred_fallthru
          _
      $region32: #{tpu_custom_call.1} parent=5 // pred_fallthru
        _
      %p365 = scmp.le.s32.totalorder 2, %s16
      // Predicated region
      $region45: #{tpu_custom_call.1} parent=5 // pred_check
        %p366 = pneg %p365
      $region46: #{tpu_custom_call.1} parent=5 // pred_check_branch
        %368 = sbr.rel (%p366) target = $region48
      $region47: #{tpu_custom_call.1} parent=5 // pred_region
        %s369 = ssub.s32 %s16, 2
        // Predicated region
        $region49: #{tpu_custom_call.1} parent=47 // pred_check
          %p370 = pneg %p113
        $region50: #{tpu_custom_call.1} parent=47 // pred_check_branch
          %372 = sbr.rel (%p370) target = $region52
        $region51: #{tpu_custom_call.1} parent=47 // pred_region
          %s373 = sand.u32 %s98, 1
          %s374 = scalar_lea.sflag [#allocation4], %s373
          %s375 = sand.u32 %s98, 1
          %s376 = smul.addr %s375, 128
          %s377 = scalar_lea.vmem [#allocation7], %s376
          %379 = dma.done %s374, 2048
        $region52: #{tpu_custom_call.1} parent=47 // pred_fallthru
          _
      $region48: #{tpu_custom_call.1} parent=5 // pred_fallthru
        _
    $region6: #{tpu_custom_call.1} parent=1 // loop_footer
      %s20 = sadd.s32 1, %s16
    $region7: #{tpu_custom_call.1} parent=1 // loop_footer_branch
      %15 = sbr.rel target = $region3
    $region8: #{tpu_custom_call.1} parent=1 // loop_exit
      _
    %380 = vsyncpa [#allocation3], 1
    %s381 = scalar_lea.sflag [#allocation3], 1
    %382 = vsyncpa %s381, 1
    %383 = vsyncpa [#allocation6], 1
    %384 = vsyncpa [#allocation4], 1
    %s385 = scalar_lea.sflag [#allocation4], 1
    %386 = vsyncpa %s385, 1

</llo_original>
